<compile_context>
chip_gen: v5e
topology: v5e:2x2
jax: 0.10.0
libtpu: 0.0.40
codegen_flags: <defaults>
</compile_context>

<pallas_src>
import numpy as np
import jax
import jax.numpy as jnp
from jax.experimental import pallas as pl
from jax.experimental.pallas import tpu as pltpu

BN_EPS = 1e-5


def _pick_tile(m):
    for t in (2048, 1024, 512, 256, 128, 64, 32, 16, 8):
        if m % t == 0:
            return t
    return m


# ----------------------------------------------------------------------------
# Kernel 1: per-channel sum / sum-of-squares of relu(x), tiled over M with a
# resident accumulator output (global batch statistics, exact under tiling).
# ----------------------------------------------------------------------------
def _relu_stats_kernel(x_ref, s_ref, sq_ref):
    y = jnp.maximum(x_ref[...].astype(jnp.float32), 0.0)
    ps = jnp.sum(y, axis=0, keepdims=True)
    pq = jnp.sum(y * y, axis=0, keepdims=True)

    @pl.when(pl.program_id(0) == 0)
    def _():
        s_ref[...] = jnp.zeros_like(s_ref)
        sq_ref[...] = jnp.zeros_like(sq_ref)

    s_ref[...] += ps
    sq_ref[...] += pq


def relu_channel_stats(x_nhwc):
    N, H, W, C = x_nhwc.shape
    M = N * H * W
    tile_m = _pick_tile(M)
    x2 = x_nhwc.reshape(M, C)
    s, sq = pl.pallas_call(
        _relu_stats_kernel,
        out_shape=(jax.ShapeDtypeStruct((1, C), jnp.float32),
                   jax.ShapeDtypeStruct((1, C), jnp.float32)),
        grid=(M // tile_m,),
        in_specs=[pl.BlockSpec((tile_m, C), lambda i: (i, 0))],
        out_specs=(pl.BlockSpec((1, C), lambda i: (0, 0)),
                   pl.BlockSpec((1, C), lambda i: (0, 0))),
        compiler_params=pltpu.CompilerParams(dimension_semantics=("arbitrary",)),
    )(x2)
    return s, sq


# ----------------------------------------------------------------------------
# Kernel 2: fused  relu -> BN affine -> zero-pad halo (VMEM scratch) ->
#           3x3 conv (stride=1, pad=1, no bias) -> + residual.
# Two variants: residual = (normalized x) @ W_shortcut (1x1+Hadamard folded)
#               residual = raw x (identity; requires Cin == Cout).
# ----------------------------------------------------------------------------
def _fused_bn_conv3x3_sc_kernel(x_ref, scale_ref, shift_ref, w3_ref, wsc_ref,
                                o_ref, xp_ref):
    # x_ref: (H, W, Cin); scale/shift: (1, 1, Cin); w3_ref: (9*Cin, Cout);
    # wsc_ref: (Cin, Cout); o_ref: (H, W, Cout); xp_ref: VMEM (H+2, W+2, Cin) f32
    H, W, Cout = o_ref.shape
    Cin = x_ref.shape[-1]
    x3 = x_ref[...]
    h3 = jnp.maximum(x3.astype(jnp.float32), 0.0) * scale_ref[...] + shift_ref[...]
    # zero-halo scratch: zero the (tiny) padded tile, then write the interior.
    xp_ref[...] = jnp.zeros_like(xp_ref)
    xp_ref[1:H + 1, 1:W + 1, :] = h3
    h2 = h3.reshape(H * W, Cin)
    # fused shortcut: 1x1 conv with the Hadamard already folded into its weight.
    acc = jnp.dot(h2, wsc_ref[...], preferred_element_type=jnp.float32)
    xp = xp_ref[...]
    w3 = w3_ref[...]
    for t in range(9):
        ky, kx = t // 3, t % 3
        patch = xp[ky:ky + H, kx:kx + W, :].reshape(H * W, Cin)
        acc = acc + jnp.dot(patch, w3[t * Cin:(t + 1) * Cin, :],
                            preferred_element_type=jnp.float32)
    o_ref[...] = acc.reshape(H, W, Cout).astype(o_ref.dtype)


def _fused_bn_conv3x3_id_kernel(x_ref, scale_ref, shift_ref, w3_ref,
                                o_ref, xp_ref):
    H, W, Cout = o_ref.shape
    Cin = x_ref.shape[-1]
    x3 = x_ref[...]
    h3 = jnp.maximum(x3.astype(jnp.float32), 0.0) * scale_ref[...] + shift_ref[...]
    xp_ref[...] = jnp.zeros_like(xp_ref)
    xp_ref[1:H + 1, 1:W + 1, :] = h3
    # identity residual uses the raw (pre-ReLU/BN) input tile already in VMEM.
    acc = x3.reshape(H * W, Cin).astype(jnp.float32)
    xp = xp_ref[...]
    w3 = w3_ref[...]
    for t in range(9):
        ky, kx = t // 3, t % 3
        patch = xp[ky:ky + H, kx:kx + W, :].reshape(H * W, Cin)
        acc = acc + jnp.dot(patch, w3[t * Cin:(t + 1) * Cin, :],
                            preferred_element_type=jnp.float32)
    o_ref[...] = acc.reshape(H, W, Cout).astype(o_ref.dtype)


def fused_stage(x_nhwc, gamma, beta, w3_hwio, shortcut_w=None):
    """One pre-act stage: relu -> BN (batch stats) -> 3x3 conv -> + residual."""
    N, H, W, Cin = x_nhwc.shape
    Cout = w3_hwio.shape[-1]
    M = N * H * W

    # Pass 1 (Pallas, gridded): global per-channel batch statistics of relu(x).
    s, sq = relu_channel_stats(x_nhwc)
    mean = s / M
    var = sq / M - mean * mean                    # biased variance (PyTorch BN training normalization)
    scale = gamma.reshape(1, Cin).astype(jnp.float32) * jax.lax.rsqrt(var + BN_EPS)
    shift = beta.reshape(1, Cin).astype(jnp.float32) - mean * scale
    scale = scale.reshape(1, 1, Cin)
    shift = shift.reshape(1, 1, Cin)

    w3 = w3_hwio.reshape(9 * Cin, Cout)           # im2col-ordered, lane-dense weight slab

    common_in_specs = [
        pl.BlockSpec((None, H, W, Cin), lambda n: (n, 0, 0, 0)),
        pl.BlockSpec((1, 1, Cin), lambda n: (0, 0, 0)),
        pl.BlockSpec((1, 1, Cin), lambda n: (0, 0, 0)),
        pl.BlockSpec((9 * Cin, Cout), lambda n: (0, 0)),
    ]
    out_spec = pl.BlockSpec((None, H, W, Cout), lambda n: (n, 0, 0, 0))
    scratch = [pltpu.VMEM((H + 2, W + 2, Cin), jnp.float32)]
    cparams = pltpu.CompilerParams(dimension_semantics=("parallel",),
                                   vmem_limit_bytes=32 * 1024 * 1024)

    if shortcut_w is not None:
        return pl.pallas_call(
            _fused_bn_conv3x3_sc_kernel,
            out_shape=jax.ShapeDtypeStruct((N, H, W, Cout), x_nhwc.dtype),
            grid=(N,),
            in_specs=common_in_specs + [pl.BlockSpec((Cin, Cout), lambda n: (0, 0))],
            out_specs=out_spec,
            scratch_shapes=scratch,
            compiler_params=cparams,
        )(x_nhwc, scale, shift, w3, shortcut_w)
    else:
        assert Cin == Cout, "identity residual requires Cin == Cout"
        return pl.pallas_call(
            _fused_bn_conv3x3_id_kernel,
            out_shape=jax.ShapeDtypeStruct((N, H, W, Cout), x_nhwc.dtype),
            grid=(N,),
            in_specs=common_in_specs,
            out_specs=out_spec,
            scratch_shapes=scratch,
            compiler_params=cparams,
        )(x_nhwc, scale, shift, w3)


# ----------------------------------------------------------------------------
# PreActBlock forward (layout glue + tiny per-channel math in JAX, hot paths
# in the Pallas kernels above).
# ----------------------------------------------------------------------------
def preact_block_forward(x_nchw, params):
    x = jnp.transpose(x_nchw, (0, 2, 3, 1))       # NCHW -> NHWC
    if "shortcut_w" in params:
        # Fold the normalized Hadamard into the 1x1 weight (exact by associativity):
        # one (Cin,Cout) weight, one MXU pass inside the fused stage kernel.
        wsc = jnp.dot(params["shortcut_w"], params["hadamard"],
                      preferred_element_type=jnp.float32)
        out1 = fused_stage(x, params["bn1_gamma"], params["bn1_beta"],
                           params["conv1_w"], shortcut_w=wsc)
    else:
        out1 = fused_stage(x, params["bn1_gamma"], params["bn1_beta"],
                           params["conv1_w"], shortcut_w=None)
    out2 = fused_stage(out1, params["bn2_gamma"], params["bn2_beta"],
                       params["conv2_w"], shortcut_w=None)
    return jnp.transpose(out2, (0, 3, 1, 2))      # back to NCHW


# ----------------------------------------------------------------------------
# Deterministic parameter construction (matches module __init__ shapes).
# ----------------------------------------------------------------------------
def _hadamard_matrix(n):
    h = np.array([[1.0]], dtype=np.float64)
    while h.shape[0] < n:
        h = np.block([[h, h], [h, -h]])
    return h


def init_params(key, in_planes, planes, stride=1):
    assert stride == 1  # TODO(synk): stride>1 conv path not implemented
    k = jax.random.split(key, 7)
    p = {
        "bn1_gamma": 1.0 + 0.1 * jax.random.normal(k[0], (in_planes,), jnp.float32),
        "bn1_beta": 0.1 * jax.random.normal(k[1], (in_planes,), jnp.float32),
        "bn2_gamma": 1.0 + 0.1 * jax.random.normal(k[2], (planes,), jnp.float32),
        "bn2_beta": 0.1 * jax.random.normal(k[3], (planes,), jnp.float32),
    }
    # PyTorch conv weights are (Cout, Cin, kH, kW); kernels consume HWIO (kH, kW, Cin, Cout).
    w1 = 0.2 * jax.random.normal(k[4], (planes, in_planes, 3, 3), jnp.float32)
    w2 = 0.2 * jax.random.normal(k[5], (planes, planes, 3, 3), jnp.float32)
    p["conv1_w"] = jnp.transpose(w1, (2, 3, 1, 0))
    p["conv2_w"] = jnp.transpose(w2, (2, 3, 1, 0))
    if stride != 1 or in_planes != planes:
        wsc = 0.2 * jax.random.normal(k[6], (planes, in_planes, 1, 1), jnp.float32)
        p["shortcut_w"] = jnp.transpose(wsc[:, :, 0, 0], (1, 0))  # (Cin, Cout)
        p["hadamard"] = jnp.asarray(_hadamard_matrix(planes) / np.sqrt(planes), jnp.float32)
    return p


# ----------------------------------------------------------------------------
# Pure-JAX reference (for correctness check; no torch).
# ----------------------------------------------------------------------------
def reference_forward(x_nchw, params):
    x = jnp.transpose(x_nchw, (0, 2, 3, 1))

    def rbn(v, g, b):
        y = jnp.maximum(v, 0.0)
        mean = jnp.mean(y, axis=(0, 1, 2), keepdims=True)
        var = jnp.mean((y - mean) ** 2, axis=(0, 1, 2), keepdims=True)
        return (y - mean) / jnp.sqrt(var + BN_EPS) * g + b

    def conv(v, w):
        return jax.lax.conv_general_dilated(
            v, w, (1, 1), "SAME", dimension_numbers=("NHWC", "HWIO", "NHWC"))

    h1 = rbn(x, params["bn1_gamma"], params["bn1_beta"])
    if "shortcut_w" in params:
        sc = jnp.einsum("nhwc,co->nhwo", h1, params["shortcut_w"])
        sc = jnp.einsum("nhwc,co->nhwo", sc, params["hadamard"])
    else:
        sc = x
    out1 = conv(h1, params["conv1_w"]) + sc
    h2 = rbn(out1, params["bn2_gamma"], params["bn2_beta"])
    out2 = conv(h2, params["conv2_w"]) + out1
    return jnp.transpose(out2, (0, 3, 1, 2))


if __name__ == "__main__":
    key = jax.random.PRNGKey(0)
    kx, kp = jax.random.split(key)

    # in_planes != planes triggers the conv1x1 + Hadamard shortcut (stride=1).
    N, in_planes, planes, H, W = 2, 4, 8, 16, 16
    x = jax.random.normal(kx, (N, in_planes, H, W), jnp.float32)
    params = init_params(kp, in_planes, planes, stride=1)

    out = preact_block_forward(x, params)
    out = jax.block_until_ready(out)

    assert out.shape == (N, planes, H, W)
    ref = reference_forward(x, params)
    np.testing.assert_allclose(np.asarray(out), np.asarray(ref), rtol=1e-3, atol=1e-3)

    print("KERNEL_OK")
</pallas_src>

<mosaic_0001>
module attributes {stable_mosaic.version = 11 : i64} {
  func.func @_relu_stats_kernel(%arg0: i32, %arg1: memref<512x4xf32, #tpu.memory_space<vmem>>, %arg2: memref<1x4xf32, #tpu.memory_space<vmem>>, %arg3: memref<1x4xf32, #tpu.memory_space<vmem>>) attributes {dimension_semantics = [#tpu.dimension_semantics<arbitrary>], iteration_bounds = array<i64: 1>, scalar_prefetch = 0 : i64, scratch_operands = 0 : i64, tpu.core_type = #tpu.core_type<tc>, window_params = [{transform_indices = @transform_0, window_bounds = array<i64: 512, 4>}, {pipeline_mode = #tpu.pipeline_mode<synchronous>, transform_indices = @transform_1, window_bounds = array<i64: 1, 4>}, {pipeline_mode = #tpu.pipeline_mode<synchronous>, transform_indices = @transform_2, window_bounds = array<i64: 1, 4>}]} {
    %c0 = arith.constant 0 : index
    %c0_0 = arith.constant 0 : index
    %0 = vector.load %arg1[%c0, %c0_0] : memref<512x4xf32, #tpu.memory_space<vmem>>, vector<512x4xf32>
    %cst = arith.constant 0.000000e+00 : f32
    %1 = vector.broadcast %cst : f32 to vector<512x4xf32>
    %2 = arith.maximumf %0, %1 : vector<512x4xf32>
    %cst_1 = arith.constant dense<0.000000e+00> : vector<4xf32>
    %3 = vector.multi_reduction <add>, %2, %cst_1 [0] : vector<512x4xf32> to vector<4xf32>
    %4 = vector.shape_cast %3 : vector<4xf32> to vector<1x4xf32>
    %5 = arith.mulf %2, %2 : vector<512x4xf32>
    %cst_2 = arith.constant dense<0.000000e+00> : vector<4xf32>
    %6 = vector.multi_reduction <add>, %5, %cst_2 [0] : vector<512x4xf32> to vector<4xf32>
    %7 = vector.shape_cast %6 : vector<4xf32> to vector<1x4xf32>
    %c0_i32 = arith.constant 0 : i32
    %8 = arith.cmpi eq, %arg0, %c0_i32 : i32
    %9 = arith.extui %8 : i1 to i32
    %c0_i32_3 = arith.constant 0 : i32
    %10 = arith.cmpi ne, %9, %c0_i32_3 : i32
    scf.if %10 {
      %cst_12 = arith.constant 0.000000e+00 : f32
      %17 = vector.broadcast %cst_12 : f32 to vector<1x4xf32>
      %c0_13 = arith.constant 0 : index
      %c0_14 = arith.constant 0 : index
      %18 = vector.load %arg2[%c0_13, %c0_14] : memref<1x4xf32, #tpu.memory_space<vmem>>, vector<1x4xf32>
      tpu.vector_store %arg2[%c0_13, %c0_14], %17 {strides = array<i32>} : memref<1x4xf32, #tpu.memory_space<vmem>>, vector<1x4xf32>,
      %cst_15 = arith.constant 0.000000e+00 : f32
      %19 = vector.broadcast %cst_15 : f32 to vector<1x4xf32>
      %c0_16 = arith.constant 0 : index
      %c0_17 = arith.constant 0 : index
      %20 = vector.load %arg3[%c0_16, %c0_17] : memref<1x4xf32, #tpu.memory_space<vmem>>, vector<1x4xf32>
      tpu.vector_store %arg3[%c0_16, %c0_17], %19 {strides = array<i32>} : memref<1x4xf32, #tpu.memory_space<vmem>>, vector<1x4xf32>,
    } else {
    }
    %c0_4 = arith.constant 0 : index
    %c0_5 = arith.constant 0 : index
    %11 = vector.load %arg2[%c0_4, %c0_5] : memref<1x4xf32, #tpu.memory_space<vmem>>, vector<1x4xf32>
    %12 = arith.addf %11, %4 : vector<1x4xf32>
    %c0_6 = arith.constant 0 : index
    %c0_7 = arith.constant 0 : index
    %13 = vector.load %arg2[%c0_6, %c0_7] : memref<1x4xf32, #tpu.memory_space<vmem>>, vector<1x4xf32>
    tpu.vector_store %arg2[%c0_6, %c0_7], %12 {strides = array<i32>} : memref<1x4xf32, #tpu.memory_space<vmem>>, vector<1x4xf32>,
    %c0_8 = arith.constant 0 : index
    %c0_9 = arith.constant 0 : index
    %14 = vector.load %arg3[%c0_8, %c0_9] : memref<1x4xf32, #tpu.memory_space<vmem>>, vector<1x4xf32>
    %15 = arith.addf %14, %7 : vector<1x4xf32>
    %c0_10 = arith.constant 0 : index
    %c0_11 = arith.constant 0 : index
    %16 = vector.load %arg3[%c0_10, %c0_11] : memref<1x4xf32, #tpu.memory_space<vmem>>, vector<1x4xf32>
    tpu.vector_store %arg3[%c0_10, %c0_11], %15 {strides = array<i32>} : memref<1x4xf32, #tpu.memory_space<vmem>>, vector<1x4xf32>,
    return
  }
  func.func @transform_0(%arg0: i32) -> (i32, i32) {
    %c0_i32 = arith.constant 0 : i32
    %c0_i32_0 = arith.constant 0 : i32
    return %arg0, %c0_i32 : i32, i32
  }
  func.func @transform_1(%arg0: i32) -> (i32, i32) {
    %c0_i32 = arith.constant 0 : i32
    %c0_i32_0 = arith.constant 0 : i32
    %c0_i32_1 = arith.constant 0 : i32
    return %c0_i32, %c0_i32_0 : i32, i32
  }
  func.func @transform_2(%arg0: i32) -> (i32, i32) {
    %c0_i32 = arith.constant 0 : i32
    %c0_i32_0 = arith.constant 0 : i32
    %c0_i32_1 = arith.constant 0 : i32
    return %c0_i32, %c0_i32_0 : i32, i32
  }
}

</mosaic_0001>

<llo_original>
// kernel: tpu_custom_call.1
$region0: #{tpu_custom_call.1}
  #allocation0 [shape = 'u32[]', space=smem, size = 0x4, offset = 0x4, fixed_abs, tag = 'smem constant byte address 0x4 - core index']
  #allocation1 [shape = 'u32[72,128]{1,0:T(1,128)}', space=vmem, size = 0x9000, scoped, tag = 'internal scratch']
  %s0 = inlined_call_operand.vmem [shape: f32[512,4], index: 0, kind: input, shape index: {}]
  %s1 = inlined_call_operand.hbm [shape: f32[1,4], index: 1, kind: output, shape index: {0}]
  %s2 = inlined_call_operand.hbm [shape: f32[1,4], index: 2, kind: output, shape index: {1}]
  %3 = xla_tuple %s1, %s2
  %s4 = sld [smem:[#allocation0]]
  $region26: #{tpu_custom_call.1} parent=0
    _
  %s6 = ssub.s32 1, %s4
  %s7 = scalar_select 0, %s6, %s4
  $region1: #{tpu_custom_call.1} parent=0
    #allocation2 [shape = 'u8[512]{0}', space=vmem, size = 0x400, scoped, tag = 'output window, operand 0, single buffered']
    #allocation3 [shape = 's32[1]{0}', space=sflag, size = 0x4, scoped, tag = 'scoped memory for tpu_custom_call.1']
    #allocation4 [shape = 'u8[512]{0}', space=vmem, size = 0x400, scoped, tag = 'output window, operand 1, single buffered']
    #allocation5 [shape = 's32[1]{0}', space=sflag, size = 0x4, scoped, tag = 'scoped memory for tpu_custom_call.1']
    %8 = vsyncpa [#allocation3], 0
    %9 = vsyncpa [#allocation5], 0
    // Predicated region
    $region2: #{tpu_custom_call.1} parent=1 // pred_check
      _
    $region3: #{tpu_custom_call.1} parent=1 // pred_check_branch
      %11 = sbr.rel (0) target = $region5
    $region4: #{tpu_custom_call.1} parent=1 // pred_region
      _
    $region5: #{tpu_custom_call.1} parent=1 // pred_fallthru
      _
    %v12 = vld [vmem:[%s0] sm:$0xff]
    %v13 = vld [vmem:[%s0 + $0x8] sm:$0xff]
    %v14 = vld [vmem:[%s0 + $0x10] sm:$0xff]
    %v15 = vld [vmem:[%s0 + $0x18] sm:$0xff]
    %v16 = vld [vmem:[%s0 + $0x20] sm:$0xff]
    %v17 = vld [vmem:[%s0 + $0x28] sm:$0xff]
    %v18 = vld [vmem:[%s0 + $0x30] sm:$0xff]
    %v19 = vld [vmem:[%s0 + $0x38] sm:$0xff]
    %v20 = vld [vmem:[%s0 + $0x40] sm:$0xff]
    %v21 = vld [vmem:[%s0 + $0x48] sm:$0xff]
    %v22 = vld [vmem:[%s0 + $0x50] sm:$0xff]
    %v23 = vld [vmem:[%s0 + $0x58] sm:$0xff]
    %v24 = vld [vmem:[%s0 + $0x60] sm:$0xff]
    %v25 = vld [vmem:[%s0 + $0x68] sm:$0xff]
    %v26 = vld [vmem:[%s0 + $0x70] sm:$0xff]
    %v27 = vld [vmem:[%s0 + $0x78] sm:$0xff]
    %v28 = vld [vmem:[%s0 + $0x80] sm:$0xff]
    %v29 = vld [vmem:[%s0 + $0x88] sm:$0xff]
    %v30 = vld [vmem:[%s0 + $0x90] sm:$0xff]
    %v31 = vld [vmem:[%s0 + $0x98] sm:$0xff]
    %v32 = vld [vmem:[%s0 + $0xa0] sm:$0xff]
    %v33 = vld [vmem:[%s0 + $0xa8] sm:$0xff]
    %v34 = vld [vmem:[%s0 + $0xb0] sm:$0xff]
    %v35 = vld [vmem:[%s0 + $0xb8] sm:$0xff]
    %v36 = vld [vmem:[%s0 + $0xc0] sm:$0xff]
    %v37 = vld [vmem:[%s0 + $0xc8] sm:$0xff]
    %v38 = vld [vmem:[%s0 + $0xd0] sm:$0xff]
    %v39 = vld [vmem:[%s0 + $0xd8] sm:$0xff]
    %v40 = vld [vmem:[%s0 + $0xe0] sm:$0xff]
    %v41 = vld [vmem:[%s0 + $0xe8] sm:$0xff]
    %v42 = vld [vmem:[%s0 + $0xf0] sm:$0xff]
    %v43 = vld [vmem:[%s0 + $0xf8] sm:$0xff]
    %v44 = vld [vmem:[%s0 + $0x100] sm:$0xff]
    %v45 = vld [vmem:[%s0 + $0x108] sm:$0xff]
    %v46 = vld [vmem:[%s0 + $0x110] sm:$0xff]
    %v47 = vld [vmem:[%s0 + $0x118] sm:$0xff]
    %v48 = vld [vmem:[%s0 + $0x120] sm:$0xff]
    %v49 = vld [vmem:[%s0 + $0x128] sm:$0xff]
    %v50 = vld [vmem:[%s0 + $0x130] sm:$0xff]
    %v51 = vld [vmem:[%s0 + $0x138] sm:$0xff]
    %v52 = vld [vmem:[%s0 + $0x140] sm:$0xff]
    %v53 = vld [vmem:[%s0 + $0x148] sm:$0xff]
    %v54 = vld [vmem:[%s0 + $0x150] sm:$0xff]
    %v55 = vld [vmem:[%s0 + $0x158] sm:$0xff]
    %v56 = vld [vmem:[%s0 + $0x160] sm:$0xff]
    %v57 = vld [vmem:[%s0 + $0x168] sm:$0xff]
    %v58 = vld [vmem:[%s0 + $0x170] sm:$0xff]
    %v59 = vld [vmem:[%s0 + $0x178] sm:$0xff]
    %v60 = vld [vmem:[%s0 + $0x180] sm:$0xff]
    %v61 = vld [vmem:[%s0 + $0x188] sm:$0xff]
    %v62 = vld [vmem:[%s0 + $0x190] sm:$0xff]
    %v63 = vld [vmem:[%s0 + $0x198] sm:$0xff]
    %v64 = vld [vmem:[%s0 + $0x1a0] sm:$0xff]
    %v65 = vld [vmem:[%s0 + $0x1a8] sm:$0xff]
    %v66 = vld [vmem:[%s0 + $0x1b0] sm:$0xff]
    %v67 = vld [vmem:[%s0 + $0x1b8] sm:$0xff]
    %v68 = vld [vmem:[%s0 + $0x1c0] sm:$0xff]
    %v69 = vld [vmem:[%s0 + $0x1c8] sm:$0xff]
    %v70 = vld [vmem:[%s0 + $0x1d0] sm:$0xff]
    %v71 = vld [vmem:[%s0 + $0x1d8] sm:$0xff]
    %v72 = vld [vmem:[%s0 + $0x1e0] sm:$0xff]
    %v73 = vld [vmem:[%s0 + $0x1e8] sm:$0xff]
    %v74 = vld [vmem:[%s0 + $0x1f0] sm:$0xff]
    %v75 = vld [vmem:[%s0 + $0x1f8] sm:$0xff]
    %v76 = vmax.f32 %v12, 0.0
    %v77 = vmax.f32 %v13, 0.0
    %v78 = vmax.f32 %v14, 0.0
    %v79 = vmax.f32 %v15, 0.0
    %v80 = vmax.f32 %v16, 0.0
    %v81 = vmax.f32 %v17, 0.0
    %v82 = vmax.f32 %v18, 0.0
    %v83 = vmax.f32 %v19, 0.0
    %v84 = vmax.f32 %v20, 0.0
    %v85 = vmax.f32 %v21, 0.0
    %v86 = vmax.f32 %v22, 0.0
    %v87 = vmax.f32 %v23, 0.0
    %v88 = vmax.f32 %v24, 0.0
    %v89 = vmax.f32 %v25, 0.0
    %v90 = vmax.f32 %v26, 0.0
    %v91 = vmax.f32 %v27, 0.0
    %v92 = vmax.f32 %v28, 0.0
    %v93 = vmax.f32 %v29, 0.0
    %v94 = vmax.f32 %v30, 0.0
    %v95 = vmax.f32 %v31, 0.0
    %v96 = vmax.f32 %v32, 0.0
    %v97 = vmax.f32 %v33, 0.0
    %v98 = vmax.f32 %v34, 0.0
    %v99 = vmax.f32 %v35, 0.0
    %v100 = vmax.f32 %v36, 0.0
    %v101 = vmax.f32 %v37, 0.0
    %v102 = vmax.f32 %v38, 0.0
    %v103 = vmax.f32 %v39, 0.0
    %v104 = vmax.f32 %v40, 0.0
    %v105 = vmax.f32 %v41, 0.0
    %v106 = vmax.f32 %v42, 0.0
    %v107 = vmax.f32 %v43, 0.0
    %v108 = vmax.f32 %v44, 0.0
    %v109 = vmax.f32 %v45, 0.0
    %v110 = vmax.f32 %v46, 0.0
    %v111 = vmax.f32 %v47, 0.0
    %v112 = vmax.f32 %v48, 0.0
    %v113 = vmax.f32 %v49, 0.0
    %v114 = vmax.f32 %v50, 0.0
    %v115 = vmax.f32 %v51, 0.0
    %v116 = vmax.f32 %v52, 0.0
    %v117 = vmax.f32 %v53, 0.0
    %v118 = vmax.f32 %v54, 0.0
    %v119 = vmax.f32 %v55, 0.0
    %v120 = vmax.f32 %v56, 0.0
    %v121 = vmax.f32 %v57, 0.0
    %v122 = vmax.f32 %v58, 0.0
    %v123 = vmax.f32 %v59, 0.0
    %v124 = vmax.f32 %v60, 0.0
    %v125 = vmax.f32 %v61, 0.0
    %v126 = vmax.f32 %v62, 0.0
    %v127 = vmax.f32 %v63, 0.0
    %v128 = vmax.f32 %v64, 0.0
    %v129 = vmax.f32 %v65, 0.0
    %v130 = vmax.f32 %v66, 0.0
    %v131 = vmax.f32 %v67, 0.0
    %v132 = vmax.f32 %v68, 0.0
    %v133 = vmax.f32 %v69, 0.0
    %v134 = vmax.f32 %v70, 0.0
    %v135 = vmax.f32 %v71, 0.0
    %v136 = vmax.f32 %v72, 0.0
    %v137 = vmax.f32 %v73, 0.0
    %v138 = vmax.f32 %v74, 0.0
    %v139 = vmax.f32 %v75, 0.0
    %vm140 = vcmask 31744
    %v141 = vsel %vm140, %v76, 0.0
    %v142 = vsel %vm140, %v77, 0.0
    %v143 = vadd.f32 %v141, %v142
    %v144 = vsel %vm140, %v78, 0.0
    %v145 = vadd.f32 %v143, %v144
    %v146 = vsel %vm140, %v79, 0.0
    %v147 = vadd.f32 %v145, %v146
    %v148 = vsel %vm140, %v80, 0.0
    %v149 = vadd.f32 %v147, %v148
    %v150 = vsel %vm140, %v81, 0.0
    %v151 = vadd.f32 %v149, %v150
    %v152 = vsel %vm140, %v82, 0.0
    %v153 = vadd.f32 %v151, %v152
    %v154 = vsel %vm140, %v83, 0.0
    %v155 = vadd.f32 %v153, %v154
    %v156 = vsel %vm140, %v84, 0.0
    %v157 = vadd.f32 %v155, %v156
    %v158 = vsel %vm140, %v85, 0.0
    %v159 = vadd.f32 %v157, %v158
    %v160 = vsel %vm140, %v86, 0.0
    %v161 = vadd.f32 %v159, %v160
    %v162 = vsel %vm140, %v87, 0.0
    %v163 = vadd.f32 %v161, %v162
    %v164 = vsel %vm140, %v88, 0.0
    %v165 = vadd.f32 %v163, %v164
    %v166 = vsel %vm140, %v89, 0.0
    %v167 = vadd.f32 %v165, %v166
    %v168 = vsel %vm140, %v90, 0.0
    %v169 = vadd.f32 %v167, %v168
    %v170 = vsel %vm140, %v91, 0.0
    %v171 = vadd.f32 %v169, %v170
    %v172 = vsel %vm140, %v92, 0.0
    %v173 = vadd.f32 %v171, %v172
    %v174 = vsel %vm140, %v93, 0.0
    %v175 = vadd.f32 %v173, %v174
    %v176 = vsel %vm140, %v94, 0.0
    %v177 = vadd.f32 %v175, %v176
    %v178 = vsel %vm140, %v95, 0.0
    %v179 = vadd.f32 %v177, %v178
    %v180 = vsel %vm140, %v96, 0.0
    %v181 = vadd.f32 %v179, %v180
    %v182 = vsel %vm140, %v97, 0.0
    %v183 = vadd.f32 %v181, %v182
    %v184 = vsel %vm140, %v98, 0.0
    %v185 = vadd.f32 %v183, %v184
    %v186 = vsel %vm140, %v99, 0.0
    %v187 = vadd.f32 %v185, %v186
    %v188 = vsel %vm140, %v100, 0.0
    %v189 = vadd.f32 %v187, %v188
    %v190 = vsel %vm140, %v101, 0.0
    %v191 = vadd.f32 %v189, %v190
    %v192 = vsel %vm140, %v102, 0.0
    %v193 = vadd.f32 %v191, %v192
    %v194 = vsel %vm140, %v103, 0.0
    %v195 = vadd.f32 %v193, %v194
    %v196 = vsel %vm140, %v104, 0.0
    %v197 = vadd.f32 %v195, %v196
    %v198 = vsel %vm140, %v105, 0.0
    %v199 = vadd.f32 %v197, %v198
    %v200 = vsel %vm140, %v106, 0.0
    %v201 = vadd.f32 %v199, %v200
    %v202 = vsel %vm140, %v107, 0.0
    %v203 = vadd.f32 %v201, %v202
    %v204 = vsel %vm140, %v108, 0.0
    %v205 = vadd.f32 %v203, %v204
    %v206 = vsel %vm140, %v109, 0.0
    %v207 = vadd.f32 %v205, %v206
    %v208 = vsel %vm140, %v110, 0.0
    %v209 = vadd.f32 %v207, %v208
    %v210 = vsel %vm140, %v111, 0.0
    %v211 = vadd.f32 %v209, %v210
    %v212 = vsel %vm140, %v112, 0.0
    %v213 = vadd.f32 %v211, %v212
    %v214 = vsel %vm140, %v113, 0.0
    %v215 = vadd.f32 %v213, %v214
    %v216 = vsel %vm140, %v114, 0.0
    %v217 = vadd.f32 %v215, %v216
    %v218 = vsel %vm140, %v115, 0.0
    %v219 = vadd.f32 %v217, %v218
    %v220 = vsel %vm140, %v116, 0.0
    %v221 = vadd.f32 %v219, %v220
    %v222 = vsel %vm140, %v117, 0.0
    %v223 = vadd.f32 %v221, %v222
    %v224 = vsel %vm140, %v118, 0.0
    %v225 = vadd.f32 %v223, %v224
    %v226 = vsel %vm140, %v119, 0.0
    %v227 = vadd.f32 %v225, %v226
    %v228 = vsel %vm140, %v120, 0.0
    %v229 = vadd.f32 %v227, %v228
    %v230 = vsel %vm140, %v121, 0.0
    %v231 = vadd.f32 %v229, %v230
    %v232 = vsel %vm140, %v122, 0.0
    %v233 = vadd.f32 %v231, %v232
    %v234 = vsel %vm140, %v123, 0.0
    %v235 = vadd.f32 %v233, %v234
    %v236 = vsel %vm140, %v124, 0.0
    %v237 = vadd.f32 %v235, %v236
    %v238 = vsel %vm140, %v125, 0.0
    %v239 = vadd.f32 %v237, %v238
    %v240 = vsel %vm140, %v126, 0.0
    %v241 = vadd.f32 %v239, %v240
    %v242 = vsel %vm140, %v127, 0.0
    %v243 = vadd.f32 %v241, %v242
    %v244 = vsel %vm140, %v128, 0.0
    %v245 = vadd.f32 %v243, %v244
    %v246 = vsel %vm140, %v129, 0.0
    %v247 = vadd.f32 %v245, %v246
    %v248 = vsel %vm140, %v130, 0.0
    %v249 = vadd.f32 %v247, %v248
    %v250 = vsel %vm140, %v131, 0.0
    %v251 = vadd.f32 %v249, %v250
    %v252 = vsel %vm140, %v132, 0.0
    %v253 = vadd.f32 %v251, %v252
    %v254 = vsel %vm140, %v133, 0.0
    %v255 = vadd.f32 %v253, %v254
    %v256 = vsel %vm140, %v134, 0.0
    %v257 = vadd.f32 %v255, %v256
    %v258 = vsel %vm140, %v135, 0.0
    %v259 = vadd.f32 %v257, %v258
    %v260 = vsel %vm140, %v136, 0.0
    %v261 = vadd.f32 %v259, %v260
    %v262 = vsel %vm140, %v137, 0.0
    %v263 = vadd.f32 %v261, %v262
    %v264 = vsel %vm140, %v138, 0.0
    %v265 = vadd.f32 %v263, %v264
    %v266 = vsel %vm140, %v139, 0.0
    %v267 = vadd.f32 %v265, %v266
    %v268 = vrot.slane %v267, 4
    %v269 = vadd.f32 %v267, %v268
    %v270 = vrot.slane %v269, 2
    %v271 = vadd.f32 %v269, %v270
    %v272 = vrot.slane %v271, 1
    %v273 = vadd.f32 %v271, %v272
    %v274 = vmul.f32 %v76, %v76
    %v275 = vmul.f32 %v77, %v77
    %v276 = vmul.f32 %v78, %v78
    %v277 = vmul.f32 %v79, %v79
    %v278 = vmul.f32 %v80, %v80
    %v279 = vmul.f32 %v81, %v81
    %v280 = vmul.f32 %v82, %v82
    %v281 = vmul.f32 %v83, %v83
    %v282 = vmul.f32 %v84, %v84
    %v283 = vmul.f32 %v85, %v85
    %v284 = vmul.f32 %v86, %v86
    %v285 = vmul.f32 %v87, %v87
    %v286 = vmul.f32 %v88, %v88
    %v287 = vmul.f32 %v89, %v89
    %v288 = vmul.f32 %v90, %v90
    %v289 = vmul.f32 %v91, %v91
    %v290 = vmul.f32 %v92, %v92
    %v291 = vmul.f32 %v93, %v93
    %v292 = vmul.f32 %v94, %v94
    %v293 = vmul.f32 %v95, %v95
    %v294 = vmul.f32 %v96, %v96
    %v295 = vmul.f32 %v97, %v97
    %v296 = vmul.f32 %v98, %v98
    %v297 = vmul.f32 %v99, %v99
    %v298 = vmul.f32 %v100, %v100
    %v299 = vmul.f32 %v101, %v101
    %v300 = vmul.f32 %v102, %v102
    %v301 = vmul.f32 %v103, %v103
    %v302 = vmul.f32 %v104, %v104
    %v303 = vmul.f32 %v105, %v105
    %v304 = vmul.f32 %v106, %v106
    %v305 = vmul.f32 %v107, %v107
    %v306 = vmul.f32 %v108, %v108
    %v307 = vmul.f32 %v109, %v109
    %v308 = vmul.f32 %v110, %v110
    %v309 = vmul.f32 %v111, %v111
    %v310 = vmul.f32 %v112, %v112
    %v311 = vmul.f32 %v113, %v113
    %v312 = vmul.f32 %v114, %v114
    %v313 = vmul.f32 %v115, %v115
    %v314 = vmul.f32 %v116, %v116
    %v315 = vmul.f32 %v117, %v117
    %v316 = vmul.f32 %v118, %v118
    %v317 = vmul.f32 %v119, %v119
    %v318 = vmul.f32 %v120, %v120
    %v319 = vmul.f32 %v121, %v121
    %v320 = vmul.f32 %v122, %v122
    %v321 = vmul.f32 %v123, %v123
    %v322 = vmul.f32 %v124, %v124
    %v323 = vmul.f32 %v125, %v125
    %v324 = vmul.f32 %v126, %v126
    %v325 = vmul.f32 %v127, %v127
    %v326 = vmul.f32 %v128, %v128
    %v327 = vmul.f32 %v129, %v129
    %v328 = vmul.f32 %v130, %v130
    %v329 = vmul.f32 %v131, %v131
    %v330 = vmul.f32 %v132, %v132
    %v331 = vmul.f32 %v133, %v133
    %v332 = vmul.f32 %v134, %v134
    %v333 = vmul.f32 %v135, %v135
    %v334 = vmul.f32 %v136, %v136
    %v335 = vmul.f32 %v137, %v137
    %v336 = vmul.f32 %v138, %v138
    %v337 = vmul.f32 %v139, %v139
    %v338 = vsel %vm140, %v274, 0.0
    %v339 = vsel %vm140, %v275, 0.0
    %v340 = vadd.f32 %v338, %v339
    %v341 = vsel %vm140, %v276, 0.0
    %v342 = vadd.f32 %v340, %v341
    %v343 = vsel %vm140, %v277, 0.0
    %v344 = vadd.f32 %v342, %v343
    %v345 = vsel %vm140, %v278, 0.0
    %v346 = vadd.f32 %v344, %v345
    %v347 = vsel %vm140, %v279, 0.0
    %v348 = vadd.f32 %v346, %v347
    %v349 = vsel %vm140, %v280, 0.0
    %v350 = vadd.f32 %v348, %v349
    %v351 = vsel %vm140, %v281, 0.0
    %v352 = vadd.f32 %v350, %v351
    %v353 = vsel %vm140, %v282, 0.0
    %v354 = vadd.f32 %v352, %v353
    %v355 = vsel %vm140, %v283, 0.0
    %v356 = vadd.f32 %v354, %v355
    %v357 = vsel %vm140, %v284, 0.0
    %v358 = vadd.f32 %v356, %v357
    %v359 = vsel %vm140, %v285, 0.0
    %v360 = vadd.f32 %v358, %v359
    %v361 = vsel %vm140, %v286, 0.0
    %v362 = vadd.f32 %v360, %v361
    %v363 = vsel %vm140, %v287, 0.0
    %v364 = vadd.f32 %v362, %v363
    %v365 = vsel %vm140, %v288, 0.0
    %v366 = vadd.f32 %v364, %v365
    %v367 = vsel %vm140, %v289, 0.0
    %v368 = vadd.f32 %v366, %v367
    %v369 = vsel %vm140, %v290, 0.0
    %v370 = vadd.f32 %v368, %v369
    %v371 = vsel %vm140, %v291, 0.0
    %v372 = vadd.f32 %v370, %v371
    %v373 = vsel %vm140, %v292, 0.0
    %v374 = vadd.f32 %v372, %v373
    %v375 = vsel %vm140, %v293, 0.0
    %v376 = vadd.f32 %v374, %v375
    %v377 = vsel %vm140, %v294, 0.0
    %v378 = vadd.f32 %v376, %v377
    %v379 = vsel %vm140, %v295, 0.0
    %v380 = vadd.f32 %v378, %v379
    %v381 = vsel %vm140, %v296, 0.0
    %v382 = vadd.f32 %v380, %v381
    %v383 = vsel %vm140, %v297, 0.0
    %v384 = vadd.f32 %v382, %v383
    %v385 = vsel %vm140, %v298, 0.0
    %v386 = vadd.f32 %v384, %v385
    %v387 = vsel %vm140, %v299, 0.0
    %v388 = vadd.f32 %v386, %v387
    %v389 = vsel %vm140, %v300, 0.0
    %v390 = vadd.f32 %v388, %v389
    %v391 = vsel %vm140, %v301, 0.0
    %v392 = vadd.f32 %v390, %v391
    %v393 = vsel %vm140, %v302, 0.0
    %v394 = vadd.f32 %v392, %v393
    %v395 = vsel %vm140, %v303, 0.0
    %v396 = vadd.f32 %v394, %v395
    %v397 = vsel %vm140, %v304, 0.0
    %v398 = vadd.f32 %v396, %v397
    %v399 = vsel %vm140, %v305, 0.0
    %v400 = vadd.f32 %v398, %v399
    %v401 = vsel %vm140, %v306, 0.0
    %v402 = vadd.f32 %v400, %v401
    %v403 = vsel %vm140, %v307, 0.0
    %v404 = vadd.f32 %v402, %v403
    %v405 = vsel %vm140, %v308, 0.0
    %v406 = vadd.f32 %v404, %v405
    %v407 = vsel %vm140, %v309, 0.0
    %v408 = vadd.f32 %v406, %v407
    %v409 = vsel %vm140, %v310, 0.0
    %v410 = vadd.f32 %v408, %v409
    %v411 = vsel %vm140, %v311, 0.0
    %v412 = vadd.f32 %v410, %v411
    %v413 = vsel %vm140, %v312, 0.0
    %v414 = vadd.f32 %v412, %v413
    %v415 = vsel %vm140, %v313, 0.0
    %v416 = vadd.f32 %v414, %v415
    %v417 = vsel %vm140, %v314, 0.0
    %v418 = vadd.f32 %v416, %v417
    %v419 = vsel %vm140, %v315, 0.0
    %v420 = vadd.f32 %v418, %v419
    %v421 = vsel %vm140, %v316, 0.0
    %v422 = vadd.f32 %v420, %v421
    %v423 = vsel %vm140, %v317, 0.0
    %v424 = vadd.f32 %v422, %v423
    %v425 = vsel %vm140, %v318, 0.0
    %v426 = vadd.f32 %v424, %v425
    %v427 = vsel %vm140, %v319, 0.0
    %v428 = vadd.f32 %v426, %v427
    %v429 = vsel %vm140, %v320, 0.0
    %v430 = vadd.f32 %v428, %v429
    %v431 = vsel %vm140, %v321, 0.0
    %v432 = vadd.f32 %v430, %v431
    %v433 = vsel %vm140, %v322, 0.0
    %v434 = vadd.f32 %v432, %v433
    %v435 = vsel %vm140, %v323, 0.0
    %v436 = vadd.f32 %v434, %v435
    %v437 = vsel %vm140, %v324, 0.0
    %v438 = vadd.f32 %v436, %v437
    %v439 = vsel %vm140, %v325, 0.0
    %v440 = vadd.f32 %v438, %v439
    %v441 = vsel %vm140, %v326, 0.0
    %v442 = vadd.f32 %v440, %v441
    %v443 = vsel %vm140, %v327, 0.0
    %v444 = vadd.f32 %v442, %v443
    %v445 = vsel %vm140, %v328, 0.0
    %v446 = vadd.f32 %v444, %v445
    %v447 = vsel %vm140, %v329, 0.0
    %v448 = vadd.f32 %v446, %v447
    %v449 = vsel %vm140, %v330, 0.0
    %v450 = vadd.f32 %v448, %v449
    %v451 = vsel %vm140, %v331, 0.0
    %v452 = vadd.f32 %v450, %v451
    %v453 = vsel %vm140, %v332, 0.0
    %v454 = vadd.f32 %v452, %v453
    %v455 = vsel %vm140, %v333, 0.0
    %v456 = vadd.f32 %v454, %v455
    %v457 = vsel %vm140, %v334, 0.0
    %v458 = vadd.f32 %v456, %v457
    %v459 = vsel %vm140, %v335, 0.0
    %v460 = vadd.f32 %v458, %v459
    %v461 = vsel %vm140, %v336, 0.0
    %v462 = vadd.f32 %v460, %v461
    %v463 = vsel %vm140, %v337, 0.0
    %v464 = vadd.f32 %v462, %v463
    %v465 = vrot.slane %v464, 4
    %v466 = vadd.f32 %v464, %v465
    %v467 = vrot.slane %v466, 2
    %v468 = vadd.f32 %v466, %v467
    %v469 = vrot.slane %v468, 1
    %v470 = vadd.f32 %v468, %v469
    %p471 = scmp.eq.s32.totalorder 0, 0
    // Predicated region
    $region6: #{tpu_custom_call.1} parent=1 // pred_check
      %p472 = pneg %p471
    $region7: #{tpu_custom_call.1} parent=1 // pred_check_branch
      %474 = sbr.rel (%p472) target = $region9
    $region8: #{tpu_custom_call.1} parent=1 // pred_region
      %vm475 = vcmask 24576
      %476 = vst.msk [vmem:[#allocation2] sm:$0x1] %vm475, 0.0
      %477 = vst.msk [vmem:[#allocation4] sm:$0x1] %vm475, 0.0
    $region9: #{tpu_custom_call.1} parent=1 // pred_fallthru
      _
    %v478 = vld [vmem:[#allocation2] sm:$0x1]
    %v479 = vadd.f32 %v478, %v273
    %vm480 = vcmask 24576
    %481 = vst.msk [vmem:[#allocation2] sm:$0x1] %vm480, %v479
    %v482 = vld [vmem:[#allocation4] sm:$0x1]
    %v483 = vadd.f32 %v482, %v470
    %484 = vst.msk [vmem:[#allocation4] sm:$0x1] %vm480, %v483
    // Predicated region
    $region10: #{tpu_custom_call.1} parent=1 // pred_check
      _
    $region11: #{tpu_custom_call.1} parent=1 // pred_check_branch
      %486 = sbr.rel (0) target = $region13
    $region12: #{tpu_custom_call.1} parent=1 // pred_region
      %488 = vsyncadd [#allocation3], 0
      %s490 = sshll.u32 [#allocation2], 4
      %s491 = int_to_ptr.vmem [resolvable:$true] %s490
      %s492 = sshll.u32 %s1, 4
      %s493 = int_to_ptr.hbm [resolvable:$true] %s492
      %495 = dma.vmem_to_hbm [thread:$0]  %s491, 16, %s493, [#allocation3]
    $region13: #{tpu_custom_call.1} parent=1 // pred_fallthru
      _
    // Predicated region
    $region14: #{tpu_custom_call.1} parent=1 // pred_check
      _
    $region15: #{tpu_custom_call.1} parent=1 // pred_check_branch
      %497 = sbr.rel (0) target = $region17
    $region16: #{tpu_custom_call.1} parent=1 // pred_region
      %499 = vsyncadd [#allocation5], 0
      %s501 = sshll.u32 [#allocation4], 4
      %s502 = int_to_ptr.vmem [resolvable:$true] %s501
      %s503 = sshll.u32 %s2, 4
      %s504 = int_to_ptr.hbm [resolvable:$true] %s503
      %506 = dma.vmem_to_hbm [thread:$0]  %s502, 16, %s504, [#allocation5]
    $region17: #{tpu_custom_call.1} parent=1 // pred_fallthru
      _
    // Predicated region
    $region18: #{tpu_custom_call.1} parent=1 // pred_check
      _
    $region19: #{tpu_custom_call.1} parent=1 // pred_check_branch
      %508 = sbr.rel (0) target = $region21
    $region20: #{tpu_custom_call.1} parent=1 // pred_region
      %510 = dma.done [#allocation3], 16
    $region21: #{tpu_custom_call.1} parent=1 // pred_fallthru
      _
    // Predicated region
    $region22: #{tpu_custom_call.1} parent=1 // pred_check
      _
    $region23: #{tpu_custom_call.1} parent=1 // pred_check_branch
      %512 = sbr.rel (0) target = $region25
    $region24: #{tpu_custom_call.1} parent=1 // pred_region
      %514 = dma.done [#allocation5], 16
    $region25: #{tpu_custom_call.1} parent=1 // pred_fallthru
      _
    %515 = vsyncpa [#allocation3], 1
    %516 = vsyncpa [#allocation5], 1

</llo_original>
